<compile_context>
chip_gen: v6e
topology: v6e:2x2x1
jax: 0.10.0
libtpu: 0.0.40
codegen_flags: <defaults>
</compile_context>

<pallas_src>
import functools

import jax
import jax.numpy as jnp
from jax.experimental import pallas as pl
from jax.experimental.pallas import tpu as pltpu

EPS = 1e-8  # torch.nn.CosineSimilarity default eps (applied per-norm, as torch does)


def _round_up(x, m):
    return ((x + m - 1) // m) * m


# --------------------------------------------------------------------------
# Fused kernel: encoder (linear) + prototype mean + query select + cosine.
#   x_ref   : (TB*Rp, Din)      bf16  TB tasks' (row-padded) raw features
#   w_ref   : (Din, D)          bf16  encoder weight (pinned)
#   b_ref   : (1, D)            f32   encoder bias   (pinned)
#   sel_ref : (TB*Sp, TB*Rp)    f32   block-diagonal [query-select ; class-avg] matrix
#   o_ref   : (TB, NQ, N)       f32   cosine logits for the TB tasks
#   emb_ref : (TB*Rp, D)        f32   VMEM scratch: this step's embeddings
#   m_ref   : (TB*Sp, D)        f32   VMEM scratch: [queries ; prototypes] per task
# --------------------------------------------------------------------------
def _fused_kernel(x_ref, w_ref, b_ref, sel_ref, o_ref, emb_ref, m_ref, *,
                  tb, sp, qp, n, nq):
    # Encoder: one big MXU matmul for all TB tasks (bf16 in, f32 accumulation).
    emb_ref[...] = (
        jnp.dot(x_ref[...], w_ref[...], preferred_element_type=jnp.float32)
        + b_ref[...]
    )

    # ONE block-diagonal selector matmul yields, for every task in the group,
    # its NQ query embeddings (first qp rows of each sp-row block) and its N
    # class prototypes (support mean, next rows).  Padded rows are exact zeros.
    m_ref[...] = jnp.dot(sel_ref[...], emb_ref[...],
                         preferred_element_type=jnp.float32)

    # Per-task cosine tail.  tb is a tiny static constant -> unrolled; every
    # slice start (t*sp, qp) is a multiple of 8, so no relayouts; per-iteration
    # live values are only a few vregs.
    for t in range(tb):
        blk = m_ref[pl.ds(t * sp, sp), :]                      # (sp, D) aligned
        sq = jnp.sum(blk * blk, axis=-1, keepdims=True)        # (sp, 1)
        # eps-clamped row normalisation: x / max(||x||, eps)  (torch semantics),
        # done with rsqrt on the otherwise-idle EUP.
        bn = blk * jax.lax.rsqrt(jnp.maximum(sq, EPS * EPS))
        logits = jax.lax.dot_general(                          # (qp, Np)
            bn[:qp, :], bn[qp:, :], (((1,), (1,)), ((), ())),
            preferred_element_type=jnp.float32)
        o_ref[t] = logits[:nq, :n]


# --------------------------------------------------------------------------
# Block-diagonal selector matrix.
# Single-task block (Sp = Qp + Np rows, Rp columns):
#   rows 0..NQ-1     : pick query row (q//Q)*(K+Q) + K + (q%Q)        (weight 1)
#   rows Qp..Qp+N-1  : average the K support rows of class c          (weight 1/K)
#   all other rows / padded columns : exact zeros.
# TB such blocks are laid out block-diagonally: (TB*Sp, TB*Rp).
# --------------------------------------------------------------------------
def _build_selector(N, K, Q, Rp, Qp, Np, TB):
    NQ = N * Q
    rows_per_cls = K + Q
    col = jnp.arange(Rp)[None, :]

    # Query-selection rows.
    qr = jnp.arange(Qp)[:, None]
    q_target = (qr // Q) * rows_per_cls + K + (qr % Q)
    qsel = jnp.where((col == q_target) & (qr < NQ), 1.0, 0.0)

    # Prototype (support-mean) rows.
    cr = jnp.arange(Np)[:, None]
    same_cls = (col // rows_per_cls) == cr
    is_support = (col % rows_per_cls) < K
    avg = jnp.where(same_cls & is_support & (cr < N), 1.0 / K, 0.0)

    sel1 = jnp.concatenate([qsel, avg], axis=0).astype(jnp.float32)   # (Sp, Rp)
    eye = jnp.eye(TB, dtype=jnp.float32)
    sel_blk = eye[:, None, :, None] * sel1[None, :, None, :]          # (TB,Sp,TB,Rp)
    return sel_blk.reshape(TB * sel1.shape[0], TB * Rp)


# --------------------------------------------------------------------------
# Full forward (mirrors MatchingNetwork.forward)
# --------------------------------------------------------------------------
def matching_network_forward(batch, setting, params):
    B, N, K, Q = setting
    Din = batch.shape[-1]
    D = params["w"].shape[-1]
    R = N * (K + Q)                  # raw rows per task
    NQ = N * Q
    Rp = _round_up(R, 8)             # sublane-aligned rows per task
    Qp = _round_up(NQ, 8)            # sublane-aligned query rows per task
    Np = _round_up(N, 8)             # sublane-aligned prototype rows per task
    Sp = Qp + Np

    # Tasks per grid step: aim for ~512 encoder rows per step, cap the unroll at 8.
    target_tb = max(1, 512 // Rp)
    TB = 1
    for d in range(1, B + 1):
        if B % d == 0 and d <= min(target_tb, 8):
            TB = d

    # Layout prep (cheap one-shot XLA ops): per-task row padding + bf16 cast.
    x3 = batch.reshape(B, R, Din)
    x3 = jnp.pad(x3, ((0, 0), (0, Rp - R), (0, 0)))
    x2 = x3.reshape(B * Rp, Din).astype(jnp.bfloat16)
    w = params["w"].astype(jnp.bfloat16)
    b = params["b"].reshape(1, D).astype(jnp.float32)
    sel = _build_selector(N, K, Q, Rp, Qp, Np, TB)        # (TB*Sp, TB*Rp) f32

    kernel = functools.partial(_fused_kernel, tb=TB, sp=Sp, qp=Qp, n=N, nq=NQ)

    flops = int(2 * B * Rp * Din * D                      # encoder
                + 2 * (B // TB) * (TB * Sp) * (TB * Rp) * D   # selector (block-diag)
                + 2 * B * Qp * D * Np)                    # cosine dots
    bytes_accessed = int(x2.size * 2 + w.size * 2 + b.size * 4
                         + sel.size * 4 + B * NQ * N * 4)

    logit = pl.pallas_call(
        kernel,
        out_shape=jax.ShapeDtypeStruct((B, NQ, N), jnp.float32),
        grid=(B // TB,),
        in_specs=[
            pl.BlockSpec((TB * Rp, Din), lambda i: (i, 0)),       # task-group rows
            pl.BlockSpec((Din, D), lambda i: (0, 0)),             # W (pinned)
            pl.BlockSpec((1, D), lambda i: (0, 0)),               # b (pinned)
            pl.BlockSpec((TB * Sp, TB * Rp), lambda i: (0, 0)),   # selector (pinned)
        ],
        out_specs=pl.BlockSpec((TB, NQ, N), lambda i: (i, 0, 0)),
        scratch_shapes=[
            pltpu.VMEM((TB * Rp, D), jnp.float32),                # embeddings
            pltpu.VMEM((TB * Sp, D), jnp.float32),                # [queries; protos]
        ],
        compiler_params=pltpu.CompilerParams(
            dimension_semantics=("parallel",),
            vmem_limit_bytes=32 * 1024 * 1024,
        ),
        cost_estimate=pl.CostEstimate(
            flops=flops,
            transcendentals=int(B * Sp),
            bytes_accessed=bytes_accessed,
        ),
    )(x2, w, b, sel)

    # TODO(synk): the spec's `encoder` is an injected module; a linear encoder is
    # used here and its non-'embedding' outputs are passed through unchanged.
    encoded_extra = {"aux": jnp.float32(0.0)}
    return {"logit": logit, **encoded_extra}


# --------------------------------------------------------------------------
# Pure-JAX reference (mirrors the PyTorch module, incl. per-norm eps clamp).
# The encoder matmul uses the same bf16-rounded operands as the kernel.
# --------------------------------------------------------------------------
def reference_forward(batch, setting, params):
    B, N, K, Q = setting
    xb = batch.astype(jnp.bfloat16).astype(jnp.float32)
    wb = params["w"].astype(jnp.bfloat16).astype(jnp.float32)
    emb = jnp.dot(xb, wb, preferred_element_type=jnp.float32) + params["b"]
    D = emb.shape[-1]
    e = emb.reshape(B, N, K + Q, D)
    support = e[:, :, :K, :]
    query = e[:, :, K:, :].reshape(B, N * Q, D)
    protos = support.mean(axis=2)                           # (B, N, D)
    q = query[:, :, None, :]                                # (B, NQ, 1, D)
    p = protos[:, None, :, :]                               # (B, 1, N, D)
    num = jnp.sum(q * p, axis=-1)                           # (B, NQ, N)
    qn = jnp.maximum(jnp.linalg.norm(q, axis=-1), EPS)
    pn = jnp.maximum(jnp.linalg.norm(p, axis=-1), EPS)
    return num / (qn * pn)


if __name__ == "__main__":
    # Small deterministic setting: B tasks, N classes, K support, Q query.
    B, N, K, Q = 2, 4, 2, 3
    Din, D = 64, 128
    S = B * N * (K + Q)

    key = jax.random.PRNGKey(0)
    k_batch, k_w, k_b = jax.random.split(key, 3)
    batch = jax.random.normal(k_batch, (S, Din), dtype=jnp.float32)
    params = {
        "w": jax.random.normal(k_w, (Din, D), dtype=jnp.float32) * 0.05,
        "b": jax.random.normal(k_b, (1, D), dtype=jnp.float32) * 0.01,
    }

    out = matching_network_forward(batch, (B, N, K, Q), params)
    logit = jax.block_until_ready(out["logit"])

    ref = reference_forward(batch, (B, N, K, Q), params)
    assert logit.shape == (B, N * Q, N), logit.shape
    max_err = float(jnp.max(jnp.abs(logit - ref)))
    assert jnp.allclose(logit, ref, rtol=2e-5, atol=2e-5), max_err

    print("KERNEL_OK")
</pallas_src>

<mosaic_0001>
module attributes {stable_mosaic.version = 11 : i64} {
  func.func @_fused_kernel(%arg0: i32, %arg1: memref<48x64xbf16, #tpu.memory_space<vmem>>, %arg2: memref<64x128xbf16, #tpu.memory_space<vmem>>, %arg3: memref<1x128xf32, #tpu.memory_space<vmem>>, %arg4: memref<48x48xf32, #tpu.memory_space<vmem>>, %arg5: memref<2x12x4xf32, #tpu.memory_space<vmem>>, %arg6: memref<48x128xf32, #tpu.memory_space<vmem>>, %arg7: memref<48x128xf32, #tpu.memory_space<vmem>>) attributes {dimension_semantics = [#tpu.dimension_semantics<parallel>], iteration_bounds = array<i64: 1>, scalar_prefetch = 0 : i64, scratch_operands = 2 : i64, tpu.core_type = #tpu.core_type<tc>, window_params = [{transform_indices = @transform_0, window_bounds = array<i64: 48, 64>}, {pipeline_mode = #tpu.pipeline_mode<synchronous>, transform_indices = @transform_1, window_bounds = array<i64: 64, 128>}, {pipeline_mode = #tpu.pipeline_mode<synchronous>, transform_indices = @transform_2, window_bounds = array<i64: 1, 128>}, {pipeline_mode = #tpu.pipeline_mode<synchronous>, transform_indices = @transform_3, window_bounds = array<i64: 48, 48>}, {transform_indices = @transform_4, window_bounds = array<i64: 2, 12, 4>}]} {
    %c0 = arith.constant 0 : index
    %c0_0 = arith.constant 0 : index
    %0 = vector.load %arg1[%c0, %c0_0] : memref<48x64xbf16, #tpu.memory_space<vmem>>, vector<48x64xbf16>
    %c0_1 = arith.constant 0 : index
    %c0_2 = arith.constant 0 : index
    %1 = vector.load %arg2[%c0_1, %c0_2] : memref<64x128xbf16, #tpu.memory_space<vmem>>, vector<64x128xbf16>
    %cst = arith.constant dense<0.000000e+00> : vector<48x128xf32>
    %2 = tpu.matmul %0, %1, %cst {dimension_numbers = #tpu.dot_dimension_numbers<[1], [0], [0], [1], [0, 0, 1, 1], [], []>} : vector<48x64xbf16>, vector<64x128xbf16>, vector<48x128xf32> -> vector<48x128xf32>
    %c0_3 = arith.constant 0 : index
    %c0_4 = arith.constant 0 : index
    %3 = vector.load %arg3[%c0_3, %c0_4] : memref<1x128xf32, #tpu.memory_space<vmem>>, vector<1x128xf32>
    %4 = vector.broadcast %3 : vector<1x128xf32> to vector<48x128xf32>
    %5 = arith.addf %2, %4 : vector<48x128xf32>
    %c0_5 = arith.constant 0 : index
    %c0_6 = arith.constant 0 : index
    %6 = vector.load %arg6[%c0_5, %c0_6] : memref<48x128xf32, #tpu.memory_space<vmem>>, vector<48x128xf32>
    tpu.vector_store %arg6[%c0_5, %c0_6], %5 {strides = array<i32>} : memref<48x128xf32, #tpu.memory_space<vmem>>, vector<48x128xf32>,
    %c0_7 = arith.constant 0 : index
    %c0_8 = arith.constant 0 : index
    %7 = vector.load %arg4[%c0_7, %c0_8] : memref<48x48xf32, #tpu.memory_space<vmem>>, vector<48x48xf32>
    %c0_9 = arith.constant 0 : index
    %c0_10 = arith.constant 0 : index
    %8 = vector.load %arg6[%c0_9, %c0_10] : memref<48x128xf32, #tpu.memory_space<vmem>>, vector<48x128xf32>
    %cst_11 = arith.constant dense<0.000000e+00> : vector<48x128xf32>
    %9 = tpu.matmul %7, %8, %cst_11 {dimension_numbers = #tpu.dot_dimension_numbers<[1], [0], [0], [1], [0, 0, 1, 1], [], []>} : vector<48x48xf32>, vector<48x128xf32>, vector<48x128xf32> -> vector<48x128xf32>
    %c0_12 = arith.constant 0 : index
    %c0_13 = arith.constant 0 : index
    %10 = vector.load %arg7[%c0_12, %c0_13] : memref<48x128xf32, #tpu.memory_space<vmem>>, vector<48x128xf32>
    tpu.vector_store %arg7[%c0_12, %c0_13], %9 {strides = array<i32>} : memref<48x128xf32, #tpu.memory_space<vmem>>, vector<48x128xf32>,
    %c0_14 = arith.constant 0 : index
    %c0_15 = arith.constant 0 : index
    %11 = vector.load %arg7[%c0_14, %c0_15] : memref<48x128xf32, #tpu.memory_space<vmem>>, vector<24x128xf32>
    %12 = arith.mulf %11, %11 : vector<24x128xf32>
    %cst_16 = arith.constant dense<0.000000e+00> : vector<24xf32>
    %13 = vector.multi_reduction <add>, %12, %cst_16 [1] : vector<24x128xf32> to vector<24xf32>
    %14 = vector.shape_cast %13 : vector<24xf32> to vector<24x1xf32>
    %cst_17 = arith.constant 1.000000e-16 : f32
    %15 = vector.broadcast %cst_17 : f32 to vector<24x1xf32>
    %16 = arith.maximumf %14, %15 : vector<24x1xf32>
    %17 = math.rsqrt %16 : vector<24x1xf32>
    %18 = vector.broadcast %17 : vector<24x1xf32> to vector<24x128xf32>
    %19 = arith.mulf %11, %18 : vector<24x128xf32>
    %20 = vector.extract_strided_slice %19 {offsets = [0, 0], sizes = [16, 128], strides = [1, 1]} : vector<24x128xf32> to vector<16x128xf32>
    %21 = vector.extract_strided_slice %19 {offsets = [16, 0], sizes = [8, 128], strides = [1, 1]} : vector<24x128xf32> to vector<8x128xf32>
    %cst_18 = arith.constant dense<0.000000e+00> : vector<16x8xf32>
    %22 = tpu.matmul %20, %21, %cst_18 {dimension_numbers = #tpu.dot_dimension_numbers<[1], [1], [0], [0], [0, 0, 1, 0], [], []>} : vector<16x128xf32>, vector<8x128xf32>, vector<16x8xf32> -> vector<16x8xf32>
    %23 = vector.extract_strided_slice %22 {offsets = [0, 0], sizes = [12, 4], strides = [1, 1]} : vector<16x8xf32> to vector<12x4xf32>
    %c0_19 = arith.constant 0 : index
    %c0_20 = arith.constant 0 : index
    %c0_21 = arith.constant 0 : index
    %24 = vector.load %arg5[%c0_19, %c0_20, %c0_21] : memref<2x12x4xf32, #tpu.memory_space<vmem>>, vector<1x12x4xf32>
    %25 = vector.shape_cast %24 : vector<1x12x4xf32> to vector<12x4xf32>
    %26 = vector.shape_cast %23 : vector<12x4xf32> to vector<1x12x4xf32>
    tpu.vector_store %arg5[%c0_19, %c0_20, %c0_21], %26 {strides = array<i32>} : memref<2x12x4xf32, #tpu.memory_space<vmem>>, vector<1x12x4xf32>,
    %c24 = arith.constant 24 : index
    %c0_22 = arith.constant 0 : index
    %27 = vector.load %arg7[%c24, %c0_22] : memref<48x128xf32, #tpu.memory_space<vmem>>, vector<24x128xf32>
    %28 = arith.mulf %27, %27 : vector<24x128xf32>
    %cst_23 = arith.constant dense<0.000000e+00> : vector<24xf32>
    %29 = vector.multi_reduction <add>, %28, %cst_23 [1] : vector<24x128xf32> to vector<24xf32>
    %30 = vector.shape_cast %29 : vector<24xf32> to vector<24x1xf32>
    %cst_24 = arith.constant 1.000000e-16 : f32
    %31 = vector.broadcast %cst_24 : f32 to vector<24x1xf32>
    %32 = arith.maximumf %30, %31 : vector<24x1xf32>
    %33 = math.rsqrt %32 : vector<24x1xf32>
    %34 = vector.broadcast %33 : vector<24x1xf32> to vector<24x128xf32>
    %35 = arith.mulf %27, %34 : vector<24x128xf32>
    %36 = vector.extract_strided_slice %35 {offsets = [0, 0], sizes = [16, 128], strides = [1, 1]} : vector<24x128xf32> to vector<16x128xf32>
    %37 = vector.extract_strided_slice %35 {offsets = [16, 0], sizes = [8, 128], strides = [1, 1]} : vector<24x128xf32> to vector<8x128xf32>
    %cst_25 = arith.constant dense<0.000000e+00> : vector<16x8xf32>
    %38 = tpu.matmul %36, %37, %cst_25 {dimension_numbers = #tpu.dot_dimension_numbers<[1], [1], [0], [0], [0, 0, 1, 0], [], []>} : vector<16x128xf32>, vector<8x128xf32>, vector<16x8xf32> -> vector<16x8xf32>
    %39 = vector.extract_strided_slice %38 {offsets = [0, 0], sizes = [12, 4], strides = [1, 1]} : vector<16x8xf32> to vector<12x4xf32>
    %c1 = arith.constant 1 : index
    %c0_26 = arith.constant 0 : index
    %c0_27 = arith.constant 0 : index
    %40 = vector.load %arg5[%c1, %c0_26, %c0_27] : memref<2x12x4xf32, #tpu.memory_space<vmem>>, vector<1x12x4xf32>
    %41 = vector.shape_cast %40 : vector<1x12x4xf32> to vector<12x4xf32>
    %42 = vector.shape_cast %39 : vector<12x4xf32> to vector<1x12x4xf32>
    tpu.vector_store %arg5[%c1, %c0_26, %c0_27], %42 {strides = array<i32>} : memref<2x12x4xf32, #tpu.memory_space<vmem>>, vector<1x12x4xf32>,
    return
  }
  func.func @transform_0(%arg0: i32) -> (i32, i32) {
    %c0_i32 = arith.constant 0 : i32
    %c0_i32_0 = arith.constant 0 : i32
    return %arg0, %c0_i32 : i32, i32
  }
  func.func @transform_1(%arg0: i32) -> (i32, i32) {
    %c0_i32 = arith.constant 0 : i32
    %c0_i32_0 = arith.constant 0 : i32
    %c0_i32_1 = arith.constant 0 : i32
    return %c0_i32, %c0_i32_0 : i32, i32
  }
  func.func @transform_2(%arg0: i32) -> (i32, i32) {
    %c0_i32 = arith.constant 0 : i32
    %c0_i32_0 = arith.constant 0 : i32
    %c0_i32_1 = arith.constant 0 : i32
    return %c0_i32, %c0_i32_0 : i32, i32
  }
  func.func @transform_3(%arg0: i32) -> (i32, i32) {
    %c0_i32 = arith.constant 0 : i32
    %c0_i32_0 = arith.constant 0 : i32
    %c0_i32_1 = arith.constant 0 : i32
    return %c0_i32, %c0_i32_0 : i32, i32
  }
  func.func @transform_4(%arg0: i32) -> (i32, i32, i32) {
    %c0_i32 = arith.constant 0 : i32
    %c0_i32_0 = arith.constant 0 : i32
    %c0_i32_1 = arith.constant 0 : i32
    return %arg0, %c0_i32, %c0_i32_0 : i32, i32, i32
  }
}

</mosaic_0001>

<llo_original>
// kernel: tpu_custom_call.1
$region0: #{tpu_custom_call.1}
  #allocation0 [shape = 'u32[]', space=smem, size = 0x4, offset = 0x4, fixed_abs, tag = 'smem constant byte address 0x4 - core index']
  #allocation1 [shape = 'u32[144,128]{1,0:T(1,128)}', space=vmem, size = 0x12000, scoped, tag = 'internal scratch']
  #allocation2 [shape = 'f32[48,128]{1,0:T(8,128)}', space=vmem, size = 0x6000, scoped, tag = 'scratch operand']
  #allocation3 [shape = 'f32[48,128]{1,0:T(8,128)}', space=vmem, size = 0x6000, scoped, tag = 'scratch operand']
  %s0 = inlined_call_operand.hbm [shape: bf16[48,64], index: 0, kind: input, shape index: {}]
  %s1 = inlined_call_operand.hbm [shape: bf16[64,128], index: 1, kind: input, shape index: {}]
  %s2 = inlined_call_operand.vmem [shape: f32[1,128], index: 2, kind: input, shape index: {}]
  %s3 = inlined_call_operand.hbm [shape: f32[48,48], index: 3, kind: input, shape index: {}]
  %s4 = inlined_call_operand.vmem [shape: f32[2,12,4], index: 4, kind: output, shape index: {}]
  %s5 = sld [smem:[#allocation0]]
  $region38: #{tpu_custom_call.1} parent=0
    _
  %s7 = ssub.s32 1, %s5
  %s8 = scalar_select 0, %s7, %s5
  $region1: #{tpu_custom_call.1} parent=0
    #allocation4 [shape = 'u8[12288]{0}', space=vmem, size = 0x3000, scoped, tag = 'input window, operand 0, single buffered']
    #allocation5 [shape = 's32[1]{0}', space=sflag, size = 0x4, scoped, tag = 'scoped memory for tpu_custom_call.1']
    #allocation6 [shape = 'u8[16384]{0}', space=vmem, size = 0x4000, scoped, tag = 'input window, operand 1, single buffered']
    #allocation7 [shape = 's32[1]{0}', space=sflag, size = 0x4, scoped, tag = 'scoped memory for tpu_custom_call.1']
    #allocation8 [shape = 'u8[24576]{0}', space=vmem, size = 0x6000, scoped, tag = 'input window, operand 3, single buffered']
    %9 = vsyncpa [#allocation5], 0
    %10 = vsyncpa [#allocation7], 0
    // Predicated region
    $region2: #{tpu_custom_call.1} parent=1 // pred_check
      _
    $region3: #{tpu_custom_call.1} parent=1 // pred_check_branch
      %12 = sbr.rel (0) target = $region5
    $region4: #{tpu_custom_call.1} parent=1 // pred_region
      %s14 = ssub.s32 384, 384
      %15 = vsyncadd [#allocation5], %s14
      %s16 = sshll.u32 [#allocation4], 4
      %s17 = int_to_ptr.vmem [resolvable:$true] %s16
      %22 = dma.hbm_to_vmem [thread:$0]  %s0, 384, %s17, [#allocation5], 64, 64, 4
    $region5: #{tpu_custom_call.1} parent=1 // pred_fallthru
      _
    // Predicated region
    $region6: #{tpu_custom_call.1} parent=1 // pred_check
      _
    $region7: #{tpu_custom_call.1} parent=1 // pred_check_branch
      %24 = sbr.rel (0) target = $region9
    $region8: #{tpu_custom_call.1} parent=1 // pred_region
      %s26 = ssub.s32 512, 512
      %27 = vsyncadd [#allocation7], %s26
      %s28 = sshll.u32 [#allocation6], 4
      %s29 = int_to_ptr.vmem [resolvable:$true] %s28
      %34 = dma.hbm_to_vmem [thread:$0]  %s1, 512, %s29, [#allocation7], 64, 64, 4
    $region9: #{tpu_custom_call.1} parent=1 // pred_fallthru
      _
    // Predicated region
    $region10: #{tpu_custom_call.1} parent=1 // pred_check
      _
    $region11: #{tpu_custom_call.1} parent=1 // pred_check_branch
      %36 = sbr.rel (0) target = $region13
    $region12: #{tpu_custom_call.1} parent=1 // pred_region
      _
    $region13: #{tpu_custom_call.1} parent=1 // pred_fallthru
      _
    // Predicated region
    $region14: #{tpu_custom_call.1} parent=1 // pred_check
      _
    $region15: #{tpu_custom_call.1} parent=1 // pred_check_branch
      %38 = sbr.rel (0) target = $region17
    $region16: #{tpu_custom_call.1} parent=1 // pred_region
      %s40 = ssub.s32 768, 768
      %41 = vsyncadd [#allocation7], %s40
      %s42 = sshll.u32 [#allocation8], 4
      %s43 = int_to_ptr.vmem [resolvable:$true] %s42
      %48 = dma.hbm_to_vmem [thread:$0]  %s3, 768, %s43, [#allocation7], 128, 128, 8
    $region17: #{tpu_custom_call.1} parent=1 // pred_fallthru
      _
    // Predicated region
    $region18: #{tpu_custom_call.1} parent=1 // pred_check
      _
    $region19: #{tpu_custom_call.1} parent=1 // pred_check_branch
      %50 = sbr.rel (0) target = $region21
    $region20: #{tpu_custom_call.1} parent=1 // pred_region
      %51 = dma.done [#allocation5], 384
    $region21: #{tpu_custom_call.1} parent=1 // pred_fallthru
      _
    // Predicated region
    $region22: #{tpu_custom_call.1} parent=1 // pred_check
      _
    $region23: #{tpu_custom_call.1} parent=1 // pred_check_branch
      %53 = sbr.rel (0) target = $region25
    $region24: #{tpu_custom_call.1} parent=1 // pred_region
      %54 = dma.done [#allocation7], 512
    $region25: #{tpu_custom_call.1} parent=1 // pred_fallthru
      _
    // Predicated region
    $region26: #{tpu_custom_call.1} parent=1 // pred_check
      _
    $region27: #{tpu_custom_call.1} parent=1 // pred_check_branch
      %56 = sbr.rel (0) target = $region29
    $region28: #{tpu_custom_call.1} parent=1 // pred_region
      %57 = dma.done [#allocation7], 768
    $region29: #{tpu_custom_call.1} parent=1 // pred_fallthru
      _
    %v59 = vld [vmem:[#allocation4] sm:$0xf]
    %v60 = vld [vmem:[#allocation4 + $0x4] sm:$0xf]
    %v61 = vld [vmem:[#allocation4 + $0x8] sm:$0xf]
    %v62 = vld [vmem:[#allocation4 + $0xc] sm:$0xf]
    %v63 = vld [vmem:[#allocation4 + $0x10] sm:$0xf]
    %v64 = vld [vmem:[#allocation4 + $0x14] sm:$0xf]
    %v65 = vld [vmem:[#allocation6] sm:$0xf]
    %v66 = vld [vmem:[#allocation6 + $0x4] sm:$0xf]
    %v67 = vld [vmem:[#allocation6 + $0x8] sm:$0xf]
    %v68 = vld [vmem:[#allocation6 + $0xc] sm:$0xf]
    %v69 = vld [vmem:[#allocation6 + $0x10] sm:$0xf]
    %v70 = vld [vmem:[#allocation6 + $0x14] sm:$0xf]
    %v71 = vld [vmem:[#allocation6 + $0x18] sm:$0xf]
    %v72 = vld [vmem:[#allocation6 + $0x1c] sm:$0xf]
    %v73 = vld [vmem:[%s2] sm:$0x1]
    %v75 = vlaneseq
    %v76 = vshrl.u32 %v75, 7
    %v77 = vsub.s32 0, %v76
    %v78 = vrot.slane %v73, %v77
    %v86 = vunpack.c.l.b16 %v59
    %v87 = vunpack.c.l.b16 %v60
    %v88 = vunpack.c.l.b16 %v61
    %v89 = vunpack.c.l.b16 %v62
    %v90 = vunpack.c.l.b16 %v63
    %v91 = vunpack.c.l.b16 %v64
    %v92 = vpack.c.b16 %v87, %v86
    %v93 = vpack.c.b16 %v89, %v88
    %v94 = vpack.c.b16 %v91, %v90
    %v103 = vunpack.c.l.b16 %v65
    %v104 = vunpack.c.l.b16 %v66
    %v105 = vunpack.c.l.b16 %v67
    %v106 = vunpack.c.l.b16 %v68
    %v107 = vunpack.c.l.b16 %v69
    %v108 = vunpack.c.l.b16 %v70
    %v109 = vunpack.c.l.b16 %v71
    %v110 = vunpack.c.l.b16 %v72
    %v111 = vpack.c.b16 %v104, %v103
    %v112 = vpack.c.b16 %v106, %v105
    %v113 = vpack.c.b16 %v108, %v107
    %v114 = vpack.c.b16 %v110, %v109
    %vm119 = vcmask 523264
    %v121 = vsel %vm119, %v92, 0
    %v124 = vsel %vm119, %v93, 0
    %v127 = vsel %vm119, %v94, 0
    %129 = vmatprep.subr.bf16.mxu0 0
    %130 = vmatpush1.bf16.msra.mxu0 0
    %131 = vmatprep.subr.bf16.mxu0 0
    %132 = vmatpush1.bf16.msra.mxu0 0
    %133 = vmatprep.subr.bf16.mxu0 0
    %134 = vmatpush1.bf16.msra.mxu0 0
    %135 = vmatprep.subr.bf16.mxu0 0
    %136 = vmatpush1.bf16.msra.mxu0 0
    %137 = vmatprep.subr.bf16.mxu0 0
    %138 = vmatpush1.bf16.msra.mxu0 %v114
    %139 = vmatprep.subr.bf16.mxu0 0
    %140 = vmatpush1.bf16.msra.mxu0 %v113
    %141 = vmatprep.subr.bf16.mxu0 0
    %142 = vmatpush1.bf16.msra.mxu0 %v112
    %143 = vmatprep.subr.bf16.mxu0 0
    %144 = vmatpush1.bf16.msra.mxu0 %v111
    %145 = vmatprep.subr.bf16.mxu0 0
    %146 = vmatpush2.bf16.msra.mxu0 0
    %147 = vmatprep.subr.bf16.mxu0 0
    %148 = vmatpush2.bf16.msra.mxu0 0
    %149 = vmatprep.subr.bf16.mxu0 0
    %150 = vmatpush2.bf16.msra.mxu0 0
    %151 = vmatprep.subr.bf16.mxu0 0
    %152 = vmatpush2.bf16.msra.mxu0 0
    %153 = vmatprep.subr.bf16.mxu0 0
    %154 = vmatpush2.bf16.msra.mxu0 0
    %155 = vmatprep.subr.bf16.mxu0 0
    %156 = vmatpush2.bf16.msra.mxu0 0
    %157 = vmatprep.subr.bf16.mxu0 0
    %158 = vmatpush2.bf16.msra.mxu0 0
    %159 = vmatprep.subr.bf16.mxu0 0
    %160 = vmatpush2.bf16.msra.mxu0 0
    %161 = vmatprep.mubr.bf16.mxu0 0
    %162 = vmatmul.mubr.bf16.gmra.mxu0 %v121
    %v163 = vpop.f32.mrf.mxu0
    %v164 = vadd.f32 %v78, %v163
    %v165 = vpop.f32.mrf.mxu0
    %v166 = vpop.f32.mrf.mxu0
    %v167 = vadd.f32 %v78, %v166
    %v168 = vpop.f32.mrf.mxu0
    %169 = vmatprep.mubr.bf16.mxu0 0
    %170 = vmatmul.mubr.bf16.gmra.mxu0 %v124
    %v171 = vpop.f32.mrf.mxu0
    %v172 = vadd.f32 %v78, %v171
    %v173 = vpop.f32.mrf.mxu0
    %v174 = vpop.f32.mrf.mxu0
    %v175 = vadd.f32 %v78, %v174
    %v176 = vpop.f32.mrf.mxu0
    %177 = vmatprep.mubr.bf16.mxu0 0
    %178 = vmatmul.mubr.bf16.gmra.mxu0 %v127
    %v179 = vpop.f32.mrf.mxu0
    %v180 = vadd.f32 %v78, %v179
    %v181 = vpop.f32.mrf.mxu0
    %v182 = vpop.f32.mrf.mxu0
    %v183 = vadd.f32 %v78, %v182
    %v184 = vpop.f32.mrf.mxu0
    %185 = vdwg.mxu0
    %186 = vst [vmem:[#allocation2] sm:$0xff] %v164
    %187 = vst [vmem:[#allocation2 + $0x8] sm:$0xff] %v167
    %188 = vst [vmem:[#allocation2 + $0x10] sm:$0xff] %v172
    %189 = vst [vmem:[#allocation2 + $0x18] sm:$0xff] %v175
    %190 = vst [vmem:[#allocation2 + $0x20] sm:$0xff] %v180
    %191 = vst [vmem:[#allocation2 + $0x28] sm:$0xff] %v183
    %v192 = vld [vmem:[#allocation8] sm:$0xff]
    %v193 = vld [vmem:[#allocation8 + $0x8] sm:$0xff]
    %v194 = vld [vmem:[#allocation8 + $0x10] sm:$0xff]
    %v195 = vld [vmem:[#allocation8 + $0x18] sm:$0xff]
    %v196 = vld [vmem:[#allocation8 + $0x20] sm:$0xff]
    %v197 = vld [vmem:[#allocation8 + $0x28] sm:$0xff]
    %v198 = vld [vmem:[#allocation2] sm:$0xff]
    %v199 = vld [vmem:[#allocation2 + $0x8] sm:$0xff]
    %v200 = vld [vmem:[#allocation2 + $0x10] sm:$0xff]
    %v201 = vld [vmem:[#allocation2 + $0x18] sm:$0xff]
    %v202 = vld [vmem:[#allocation2 + $0x20] sm:$0xff]
    %v203 = vld [vmem:[#allocation2 + $0x28] sm:$0xff]
    %vm204 = vcmask 392192
    %v206 = vsel %vm204, %v192, 0
    %v209 = vsel %vm204, %v193, 0
    %v212 = vsel %vm204, %v194, 0
    %v215 = vsel %vm204, %v195, 0
    %v218 = vsel %vm204, %v196, 0
    %v221 = vsel %vm204, %v197, 0
    %223 = vmatprep.subr.mxu0 0.0
    %224 = vmatpush1.msra.mxu0 0.0
    %225 = vmatprep.subr.mxu0 0.0
    %226 = vmatpush1.msra.mxu0 0.0
    %227 = vmatprep.subr.mxu0 0.0
    %228 = vmatpush1.msra.mxu0 0.0
    %229 = vmatprep.subr.mxu0 0.0
    %230 = vmatpush1.msra.mxu0 0.0
    %231 = vmatprep.subr.mxu0 0.0
    %232 = vmatpush1.msra.mxu0 0.0
    %233 = vmatprep.subr.mxu0 0.0
    %234 = vmatpush1.msra.mxu0 0.0
    %235 = vmatprep.subr.mxu0 0.0
    %236 = vmatpush1.msra.mxu0 0.0
    %237 = vmatprep.subr.mxu0 0.0
    %238 = vmatpush1.msra.mxu0 0.0
    %239 = vmatprep.subr.mxu0 0.0
    %240 = vmatpush1.msra.mxu0 0.0
    %241 = vmatprep.subr.mxu0 0.0
    %242 = vmatpush1.msra.mxu0 0.0
    %243 = vmatprep.subr.mxu0 0.0
    %244 = vmatpush1.msra.mxu0 %v203
    %245 = vmatprep.subr.mxu0 0.0
    %246 = vmatpush1.msra.mxu0 %v202
    %247 = vmatprep.subr.mxu0 0.0
    %248 = vmatpush1.msra.mxu0 %v201
    %249 = vmatprep.subr.mxu0 0.0
    %250 = vmatpush1.msra.mxu0 %v200
    %251 = vmatprep.subr.mxu0 0.0
    %252 = vmatpush1.msra.mxu0 %v199
    %253 = vmatprep.subr.mxu0 0.0
    %254 = vmatpush1.msra.mxu0 %v198
    %255 = vmatprep.subr.mxu0 0.0
    %256 = vmatpush2.msra.mxu0 0.0
    %257 = vmatprep.subr.mxu0 0.0
    %258 = vmatpush2.msra.mxu0 0.0
    %259 = vmatprep.subr.mxu0 0.0
    %260 = vmatpush2.msra.mxu0 0.0
    %261 = vmatprep.subr.mxu0 0.0
    %262 = vmatpush2.msra.mxu0 0.0
    %263 = vmatprep.subr.mxu0 0.0
    %264 = vmatpush2.msra.mxu0 0.0
    %265 = vmatprep.subr.mxu0 0.0
    %266 = vmatpush2.msra.mxu0 0.0
    %267 = vmatprep.subr.mxu0 0.0
    %268 = vmatpush2.msra.mxu0 0.0
    %269 = vmatprep.subr.mxu0 0.0
    %270 = vmatpush2.msra.mxu0 0.0
    %271 = vmatprep.subr.mxu0 0.0
    %272 = vmatpush2.msra.mxu0 0.0
    %273 = vmatprep.subr.mxu0 0.0
    %274 = vmatpush2.msra.mxu0 0.0
    %275 = vmatprep.subr.mxu0 0.0
    %276 = vmatpush2.msra.mxu0 0.0
    %277 = vmatprep.subr.mxu0 0.0
    %278 = vmatpush2.msra.mxu0 0.0
    %279 = vmatprep.subr.mxu0 0.0
    %280 = vmatpush2.msra.mxu0 0.0
    %281 = vmatprep.subr.mxu0 0.0
    %282 = vmatpush2.msra.mxu0 0.0
    %283 = vmatprep.subr.mxu0 0.0
    %284 = vmatpush2.msra.mxu0 0.0
    %285 = vmatprep.subr.mxu0 0.0
    %286 = vmatpush2.msra.mxu0 0.0
    %287 = vmatprep.mubr.f32.mxu0 0.0
    %288 = vmatmul.mubr.f32.gmra.mxu0 %v206
    %v289 = vpop.f32.mrf.mxu0
    %v290 = vadd.f32 0.0, %v289
    %v291 = vpop.f32.mrf.mxu0
    %292 = vmatprep.mubr.f32.mxu0 0.0
    %293 = vmatmul.mubr.f32.gmra.mxu0 %v209
    %v294 = vpop.f32.mrf.mxu0
    %v295 = vadd.f32 0.0, %v294
    %v296 = vpop.f32.mrf.mxu0
    %297 = vmatprep.mubr.f32.mxu0 0.0
    %298 = vmatmul.mubr.f32.gmra.mxu0 %v212
    %v299 = vpop.f32.mrf.mxu0
    %v300 = vadd.f32 0.0, %v299
    %v301 = vpop.f32.mrf.mxu0
    %302 = vmatprep.mubr.f32.mxu0 0.0
    %303 = vmatmul.mubr.f32.gmra.mxu0 %v215
    %v304 = vpop.f32.mrf.mxu0
    %v305 = vadd.f32 0.0, %v304
    %v306 = vpop.f32.mrf.mxu0
    %307 = vmatprep.mubr.f32.mxu0 0.0
    %308 = vmatmul.mubr.f32.gmra.mxu0 %v218
    %v309 = vpop.f32.mrf.mxu0
    %v310 = vadd.f32 0.0, %v309
    %v311 = vpop.f32.mrf.mxu0
    %312 = vmatprep.mubr.f32.mxu0 0.0
    %313 = vmatmul.mubr.f32.gmra.mxu0 %v221
    %v314 = vpop.f32.mrf.mxu0
    %v315 = vadd.f32 0.0, %v314
    %v316 = vpop.f32.mrf.mxu0
    %317 = vdwg.mxu0
    %318 = vst [vmem:[#allocation3] sm:$0xff] %v290
    %319 = vst [vmem:[#allocation3 + $0x8] sm:$0xff] %v295
    %320 = vst [vmem:[#allocation3 + $0x10] sm:$0xff] %v300
    %321 = vst [vmem:[#allocation3 + $0x18] sm:$0xff] %v305
    %322 = vst [vmem:[#allocation3 + $0x20] sm:$0xff] %v310
    %323 = vst [vmem:[#allocation3 + $0x28] sm:$0xff] %v315
    %v324 = vld [vmem:[#allocation3] sm:$0xff]
    %v325 = vld [vmem:[#allocation3 + $0x8] sm:$0xff]
    %v326 = vld [vmem:[#allocation3 + $0x10] sm:$0xff]
    %v327 = vmul.f32 %v324, %v324
    %v328 = vmul.f32 %v325, %v325
    %v329 = vmul.f32 %v326, %v326
    %330 = vadd.xlane.f32.xlu0 %v327
    %v331 = vpop.xlane.xlu0 %330
    %332 = vadd.xlane.f32.xlu0 %v328
    %v333 = vpop.xlane.xlu0 %332
    %334 = vadd.xlane.f32.xlu0 %v329
    %v335 = vpop.xlane.xlu0 %334
    %v336 = vmax.f32 %v331, 1e-16
    %v337 = vmax.f32 %v333, 1e-16
    %v338 = vmax.f32 %v335, 1e-16
    %v339 = vrsqrt.pop %v336
    %v340 = vrsqrt.pop %v337
    %v341 = vrsqrt.pop %v338
    %v342 = vmul.f32 %v324, %v339
    %v343 = vmul.f32 %v325, %v340
    %v344 = vmul.f32 %v326, %v341
    %345 = vmatprep.subr.mxu0 0.0
    %346 = vmatpush1.xpose.msra.mxu0 0.0
    %347 = vmatprep.subr.mxu0 0.0
    %348 = vmatpush1.xpose.msra.mxu0 0.0
    %349 = vmatprep.subr.mxu0 0.0
    %350 = vmatpush1.xpose.msra.mxu0 0.0
    %351 = vmatprep.subr.mxu0 0.0
    %352 = vmatpush1.xpose.msra.mxu0 0.0
    %353 = vmatprep.subr.mxu0 0.0
    %354 = vmatpush1.xpose.msra.mxu0 0.0
    %355 = vmatprep.subr.mxu0 0.0
    %356 = vmatpush1.xpose.msra.mxu0 0.0
    %357 = vmatprep.subr.mxu0 0.0
    %358 = vmatpush1.xpose.msra.mxu0 0.0
    %359 = vmatprep.subr.mxu0 0.0
    %360 = vmatpush1.xpose.msra.mxu0 0.0
    %361 = vmatprep.subr.mxu0 0.0
    %362 = vmatpush1.xpose.msra.mxu0 0.0
    %363 = vmatprep.subr.mxu0 0.0
    %364 = vmatpush1.xpose.msra.mxu0 0.0
    %365 = vmatprep.subr.mxu0 0.0
    %366 = vmatpush1.xpose.msra.mxu0 0.0
    %367 = vmatprep.subr.mxu0 0.0
    %368 = vmatpush1.xpose.msra.mxu0 0.0
    %369 = vmatprep.subr.mxu0 0.0
    %370 = vmatpush1.xpose.msra.mxu0 0.0
    %371 = vmatprep.subr.mxu0 0.0
    %372 = vmatpush1.xpose.msra.mxu0 0.0
    %373 = vmatprep.subr.mxu0 0.0
    %374 = vmatpush1.xpose.msra.mxu0 0.0
    %375 = vmatprep.subr.mxu0 0.0
    %376 = vmatpush1.xpose.msra.mxu0 %v344
    %377 = vmatprep.subr.mxu0 0.0
    %378 = vmatpush2.xpose.msra.mxu0 0.0
    %379 = vmatprep.subr.mxu0 0.0
    %380 = vmatpush2.xpose.msra.mxu0 0.0
    %381 = vmatprep.subr.mxu0 0.0
    %382 = vmatpush2.xpose.msra.mxu0 0.0
    %383 = vmatprep.subr.mxu0 0.0
    %384 = vmatpush2.xpose.msra.mxu0 0.0
    %385 = vmatprep.subr.mxu0 0.0
    %386 = vmatpush2.xpose.msra.mxu0 0.0
    %387 = vmatprep.subr.mxu0 0.0
    %388 = vmatpush2.xpose.msra.mxu0 0.0
    %389 = vmatprep.subr.mxu0 0.0
    %390 = vmatpush2.xpose.msra.mxu0 0.0
    %391 = vmatprep.subr.mxu0 0.0
    %392 = vmatpush2.xpose.msra.mxu0 0.0
    %393 = vmatprep.subr.mxu0 0.0
    %394 = vmatpush2.xpose.msra.mxu0 0.0
    %395 = vmatprep.subr.mxu0 0.0
    %396 = vmatpush2.xpose.msra.mxu0 0.0
    %397 = vmatprep.subr.mxu0 0.0
    %398 = vmatpush2.xpose.msra.mxu0 0.0
    %399 = vmatprep.subr.mxu0 0.0
    %400 = vmatpush2.xpose.msra.mxu0 0.0
    %401 = vmatprep.subr.mxu0 0.0
    %402 = vmatpush2.xpose.msra.mxu0 0.0
    %403 = vmatprep.subr.mxu0 0.0
    %404 = vmatpush2.xpose.msra.mxu0 0.0
    %405 = vmatprep.subr.mxu0 0.0
    %406 = vmatpush2.xpose.msra.mxu0 0.0
    %407 = vmatprep.subr.mxu0 0.0
    %408 = vmatpush2.xpose.msra.mxu0 0.0
    %409 = vmatprep.mubr.f32.mxu0 0.0
    %410 = vmatmul.mubr.f32.gmra.mxu0 %v342
    %v411 = vpop.f32.mrf.mxu0
    %v412 = vadd.f32 0.0, %v411
    %v413 = vpop.f32.mrf.mxu0
    %414 = vmatprep.mubr.f32.mxu0 0.0
    %415 = vmatmul.mubr.f32.gmra.mxu0 %v343
    %v416 = vpop.f32.mrf.mxu0
    %v417 = vadd.f32 0.0, %v416
    %v418 = vpop.f32.mrf.mxu0
    %419 = vdwg.mxu0
    %vm420 = vcmask 31744
    %421 = vst.msk [vmem:[%s4] sm:$0xff] %vm420, %v412
    %vm422 = vcmask 27648
    %423 = vst.msk [vmem:[%s4 + $0x8] sm:$0xf] %vm422, %v417
    %v424 = vld [vmem:[#allocation3 + $0x18] sm:$0xff]
    %v425 = vld [vmem:[#allocation3 + $0x20] sm:$0xff]
    %v426 = vld [vmem:[#allocation3 + $0x28] sm:$0xff]
    %v427 = vmul.f32 %v424, %v424
    %v428 = vmul.f32 %v425, %v425
    %v429 = vmul.f32 %v426, %v426
    %430 = vadd.xlane.f32.xlu0 %v427
    %v431 = vpop.xlane.xlu0 %430
    %432 = vadd.xlane.f32.xlu0 %v428
    %v433 = vpop.xlane.xlu0 %432
    %434 = vadd.xlane.f32.xlu0 %v429
    %v435 = vpop.xlane.xlu0 %434
    %v436 = vmax.f32 %v431, 1e-16
    %v437 = vmax.f32 %v433, 1e-16
    %v438 = vmax.f32 %v435, 1e-16
    %v439 = vrsqrt.pop %v436
    %v440 = vrsqrt.pop %v437
    %v441 = vrsqrt.pop %v438
    %v442 = vmul.f32 %v424, %v439
    %v443 = vmul.f32 %v425, %v440
    %v444 = vmul.f32 %v426, %v441
    %445 = vmatprep.subr.mxu0 0.0
    %446 = vmatpush1.xpose.msra.mxu0 0.0
    %447 = vmatprep.subr.mxu0 0.0
    %448 = vmatpush1.xpose.msra.mxu0 0.0
    %449 = vmatprep.subr.mxu0 0.0
    %450 = vmatpush1.xpose.msra.mxu0 0.0
    %451 = vmatprep.subr.mxu0 0.0
    %452 = vmatpush1.xpose.msra.mxu0 0.0
    %453 = vmatprep.subr.mxu0 0.0
    %454 = vmatpush1.xpose.msra.mxu0 0.0
    %455 = vmatprep.subr.mxu0 0.0
    %456 = vmatpush1.xpose.msra.mxu0 0.0
    %457 = vmatprep.subr.mxu0 0.0
    %458 = vmatpush1.xpose.msra.mxu0 0.0
    %459 = vmatprep.subr.mxu0 0.0
    %460 = vmatpush1.xpose.msra.mxu0 0.0
    %461 = vmatprep.subr.mxu0 0.0
    %462 = vmatpush1.xpose.msra.mxu0 0.0
    %463 = vmatprep.subr.mxu0 0.0
    %464 = vmatpush1.xpose.msra.mxu0 0.0
    %465 = vmatprep.subr.mxu0 0.0
    %466 = vmatpush1.xpose.msra.mxu0 0.0
    %467 = vmatprep.subr.mxu0 0.0
    %468 = vmatpush1.xpose.msra.mxu0 0.0
    %469 = vmatprep.subr.mxu0 0.0
    %470 = vmatpush1.xpose.msra.mxu0 0.0
    %471 = vmatprep.subr.mxu0 0.0
    %472 = vmatpush1.xpose.msra.mxu0 0.0
    %473 = vmatprep.subr.mxu0 0.0
    %474 = vmatpush1.xpose.msra.mxu0 0.0
    %475 = vmatprep.subr.mxu0 0.0
    %476 = vmatpush1.xpose.msra.mxu0 %v444
    %477 = vmatprep.subr.mxu0 0.0
    %478 = vmatpush2.xpose.msra.mxu0 0.0
    %479 = vmatprep.subr.mxu0 0.0
    %480 = vmatpush2.xpose.msra.mxu0 0.0
    %481 = vmatprep.subr.mxu0 0.0
    %482 = vmatpush2.xpose.msra.mxu0 0.0
    %483 = vmatprep.subr.mxu0 0.0
    %484 = vmatpush2.xpose.msra.mxu0 0.0
    %485 = vmatprep.subr.mxu0 0.0
    %486 = vmatpush2.xpose.msra.mxu0 0.0
    %487 = vmatprep.subr.mxu0 0.0
    %488 = vmatpush2.xpose.msra.mxu0 0.0
    %489 = vmatprep.subr.mxu0 0.0
    %490 = vmatpush2.xpose.msra.mxu0 0.0
    %491 = vmatprep.subr.mxu0 0.0
    %492 = vmatpush2.xpose.msra.mxu0 0.0
    %493 = vmatprep.subr.mxu0 0.0
    %494 = vmatpush2.xpose.msra.mxu0 0.0
    %495 = vmatprep.subr.mxu0 0.0
    %496 = vmatpush2.xpose.msra.mxu0 0.0
    %497 = vmatprep.subr.mxu0 0.0
    %498 = vmatpush2.xpose.msra.mxu0 0.0
    %499 = vmatprep.subr.mxu0 0.0
    %500 = vmatpush2.xpose.msra.mxu0 0.0
    %501 = vmatprep.subr.mxu0 0.0
    %502 = vmatpush2.xpose.msra.mxu0 0.0
    %503 = vmatprep.subr.mxu0 0.0
    %504 = vmatpush2.xpose.msra.mxu0 0.0
    %505 = vmatprep.subr.mxu0 0.0
    %506 = vmatpush2.xpose.msra.mxu0 0.0
    %507 = vmatprep.subr.mxu0 0.0
    %508 = vmatpush2.xpose.msra.mxu0 0.0
    %509 = vmatprep.mubr.f32.mxu0 0.0
    %510 = vmatmul.mubr.f32.gmra.mxu0 %v442
    %v511 = vpop.f32.mrf.mxu0
    %v512 = vadd.f32 0.0, %v511
    %v513 = vpop.f32.mrf.mxu0
    %514 = vmatprep.mubr.f32.mxu0 0.0
    %515 = vmatmul.mubr.f32.gmra.mxu0 %v443
    %v516 = vpop.f32.mrf.mxu0
    %v517 = vadd.f32 0.0, %v516
    %v518 = vpop.f32.mrf.mxu0
    %519 = vdwg.mxu0
    %s520 = scalar_lea.vmem %s4, 16
    %521 = vst.msk [vmem:[%s520] sm:$0xff] %vm420, %v512
    %522 = vst.msk [vmem:[%s520 + $0x8] sm:$0xf] %vm422, %v517
    // Predicated region
    $region30: #{tpu_custom_call.1} parent=1 // pred_check
      _
    $region31: #{tpu_custom_call.1} parent=1 // pred_check_branch
      %524 = sbr.rel (0) target = $region33
    $region32: #{tpu_custom_call.1} parent=1 // pred_region
      _
    $region33: #{tpu_custom_call.1} parent=1 // pred_fallthru
      _
    // Predicated region
    $region34: #{tpu_custom_call.1} parent=1 // pred_check
      _
    $region35: #{tpu_custom_call.1} parent=1 // pred_check_branch
      %526 = sbr.rel (0) target = $region37
    $region36: #{tpu_custom_call.1} parent=1 // pred_region
      _
    $region37: #{tpu_custom_call.1} parent=1 // pred_fallthru
      _
    %527 = vsyncpa [#allocation5], 1
    %528 = vsyncpa [#allocation7], 1

</llo_original>
